<compile_context>
chip_gen: v7x
topology: tpu7x:2x2x1
jax: 0.10.0
libtpu: 0.0.40
codegen_flags: <defaults>
</compile_context>

<pallas_src>
import functools
import math

import jax
import jax.numpy as jnp
from jax.experimental import pallas as pl
from jax.experimental.pallas import tpu as pltpu

LANE = 128
SUBLANE = 8


def _round_up(n, m):
    return ((n + m - 1) // m) * m


def _pad2d(a, rows, cols):
    return jnp.pad(a, ((0, rows - a.shape[0]), (0, cols - a.shape[1])))


def _mlp_kernel(x_ref, w1_ref, b1_ref, w2_ref, b2_ref, w3t_ref, b3_ref, o_ref):
    cdt = w1_ref.dtype
    # Cast x to the compute dtype inside the kernel (no wrapper-side copy of x).
    x = x_ref[...].astype(cdt)
    # Layer 1: Linear(hidden_dim2 -> hidden_dim3) + ReLU, f32 accumulation.
    h1 = jnp.dot(x, w1_ref[...], preferred_element_type=jnp.float32)
    h1 = jnp.maximum(h1 + b1_ref[...], 0.0)
    # Layer 2: Linear(hidden_dim3 -> hidden_dim1) + ReLU.
    h2 = jnp.dot(h1.astype(cdt), w2_ref[...], preferred_element_type=jnp.float32)
    h2 = jnp.maximum(h2 + b2_ref[...], 0.0)
    # Layer 3: Linear(hidden_dim1 -> 1).  Elementwise multiply + lane reduce
    # (VPU + XLU) instead of an N=1 MXU matmul; stores a (tb, 1) block so the
    # HBM writeback is ~4 B/row instead of 512 B/row.
    w3 = w3t_ref[...].astype(jnp.float32)                     # (1, d_h1)
    z = jnp.sum(h2 * w3, axis=-1, keepdims=True) + b3_ref[...]
    o_ref[...] = z.astype(o_ref.dtype)


def prepare_params(params, compute_dtype=jnp.bfloat16):
    """Pad hidden dims lane-dense + cast ONCE, outside the training hot loop.

    Zero padding is exact: padded weight columns get bias 0 -> ReLU(0)=0 and
    padded weight rows are 0, so real outputs are unchanged.
    """
    w1, b1, w2, b2, w3, b3 = params
    f_in, h3 = w1.shape
    h1d = w2.shape[1]
    d_h3 = _round_up(h3, LANE)
    d_h1 = _round_up(h1d, LANE)
    w1p = _pad2d(w1, f_in, d_h3).astype(compute_dtype)     # (f_in, d_h3)
    b1p = _pad2d(b1, 1, d_h3).astype(jnp.float32)           # (1, d_h3)
    w2p = _pad2d(w2, d_h3, d_h1).astype(compute_dtype)      # (d_h3, d_h1)
    b2p = _pad2d(b2, 1, d_h1).astype(jnp.float32)           # (1, d_h1)
    w3t = _pad2d(w3.T, 1, d_h1).astype(compute_dtype)       # (1, d_h1)
    b3p = jnp.reshape(b3, (1, 1)).astype(jnp.float32)       # (1, 1)
    return (w1p, b1p, w2p, b2p, w3t, b3p)


@functools.partial(jax.jit, static_argnames=("block_batch",))
def discriminator_forward(x, prepared_params, *, block_batch=512):
    """Runs the 3-layer MLP discriminator as one Pallas TPU kernel.

    `prepared_params` must come from prepare_params() (padded / pre-cast).
    """
    w1p, b1p, w2p, b2p, w3t, b3p = prepared_params
    B, f_in = x.shape
    assert w1p.shape[0] == f_in, (w1p.shape, f_in)

    # --- Batch tiling ------------------------------------------------------
    bp_min = _round_up(B, SUBLANE)
    tb = _round_up(min(block_batch, bp_min), SUBLANE)
    if bp_min <= tb and bp_min >= 2 * SUBLANE:
        # Split into >=2 grid steps so the "parallel" batch axis can be
        # sharded across both v7x TensorCores (neutral on v5e/v6e).
        tb = _round_up((bp_min + 1) // 2, SUBLANE)
    bp = _round_up(bp_min, tb)

    # Only the batch axis is padded (feature axis uses a full-dim block),
    # and only when the batch is ragged.
    xp = x if bp == B else jnp.pad(x, ((0, bp - B), (0, 0)))

    grid = (bp // tb,)

    x_spec = pl.BlockSpec((tb, f_in), lambda i: (i, 0))
    out_spec = pl.BlockSpec((tb, 1), lambda i: (i, 0))

    def resident(a):
        # Constant index_map: tile DMA'd once, stays VMEM-resident across all
        # batch grid steps.
        # TODO(synk): pipeline_mode=pl.Buffered(1) would halve the resident
        # footprint (matters on v7x's 64 MiB VMEM for large hidden dims);
        # left at default buffering for portability at these sizes.
        return pl.BlockSpec(a.shape, lambda i: (0, 0))

    # --- VMEM budget (double-buffered x/out tiles + resident weights) ------
    weights_bytes = sum(int(math.prod(p.shape)) * p.dtype.itemsize
                        for p in prepared_params)
    vmem_est = (2 * tb * f_in * x.dtype.itemsize     # x tiles
                + 2 * tb * 4                          # out tiles (f32, 1 lane)
                + 2 * weights_bytes                   # resident weights/biases
                + (4 << 20))                          # intermediates / slack
    vmem_limit = int(min(max(vmem_est, 32 << 20), 64 << 20))

    out = pl.pallas_call(
        _mlp_kernel,
        out_shape=jax.ShapeDtypeStruct((bp, 1), jnp.float32),
        grid=grid,
        in_specs=[
            x_spec,
            resident(w1p), resident(b1p),
            resident(w2p), resident(b2p),
            resident(w3t), resident(b3p),
        ],
        out_specs=out_spec,
        compiler_params=pltpu.CompilerParams(
            dimension_semantics=("parallel",),
            vmem_limit_bytes=vmem_limit),
    )(xp, w1p, b1p, w2p, b2p, w3t, b3p)

    return out if bp == B else out[:B]


def init_params(key, hidden_dim1, hidden_dim2, hidden_dim3):
    """PyTorch-default-style init (uniform +-1/sqrt(fan_in)).

    Weights stored transposed relative to nn.Linear: [in, out].
    Biases stored as [1, out].
    """
    ks = jax.random.split(key, 6)

    def lin(kw, kb, fan_in, fan_out):
        bound = 1.0 / jnp.sqrt(float(fan_in))
        w = jax.random.uniform(kw, (fan_in, fan_out), jnp.float32, -bound, bound)
        b = jax.random.uniform(kb, (1, fan_out), jnp.float32, -bound, bound)
        return w, b

    w1, b1 = lin(ks[0], ks[1], hidden_dim2, hidden_dim3)
    w2, b2 = lin(ks[2], ks[3], hidden_dim3, hidden_dim1)
    w3, b3 = lin(ks[4], ks[5], hidden_dim1, 1)
    return (w1, b1, w2, b2, w3, b3)


def reference_forward(x, params):
    w1, b1, w2, b2, w3, b3 = params
    h1 = jnp.maximum(x @ w1 + b1, 0.0)
    h2 = jnp.maximum(h1 @ w2 + b2, 0.0)
    return h2 @ w3 + b3


if __name__ == "__main__":
    # Small shapes consistent with the module: Discriminator(h1, h2, h3),
    # input features = hidden_dim2.
    hidden_dim1, hidden_dim2, hidden_dim3 = 16, 32, 64
    batch = 8

    key = jax.random.PRNGKey(0)
    kx, kp = jax.random.split(key)
    x = jax.random.normal(kx, (batch, hidden_dim2), jnp.float32)
    params = init_params(kp, hidden_dim1, hidden_dim2, hidden_dim3)

    ref = reference_forward(x, params)

    # Exact f32 path (matches PyTorch fp32 forward semantics).
    p_f32 = prepare_params(params, compute_dtype=jnp.float32)
    out = jax.block_until_ready(discriminator_forward(x, p_f32))
    assert out.shape == (batch, 1), out.shape
    assert jnp.allclose(out, ref, atol=1e-5, rtol=1e-5), "f32 mismatch vs reference"

    # Default high-throughput path: bf16 operands + f32 MXU accumulation.
    p_bf16 = prepare_params(params)
    out_bf16 = jax.block_until_ready(discriminator_forward(x, p_bf16))
    assert out_bf16.shape == (batch, 1), out_bf16.shape
    assert jnp.allclose(out_bf16, ref, atol=5e-2, rtol=5e-2), "bf16 mismatch vs reference"

    # TODO(synk): torch.manual_seed(1)/cuda seed in forward has no compute effect; omitted.
    print("KERNEL_OK")
</pallas_src>

<mosaic_0001>
module attributes {stable_mosaic.version = 11 : i64} {
  func.func @_mlp_kernel(%arg0: i32, %arg1: memref<8x32xf32, #tpu.memory_space<vmem>>, %arg2: memref<32x128xf32, #tpu.memory_space<vmem>>, %arg3: memref<1x128xf32, #tpu.memory_space<vmem>>, %arg4: memref<128x128xf32, #tpu.memory_space<vmem>>, %arg5: memref<1x128xf32, #tpu.memory_space<vmem>>, %arg6: memref<1x128xf32, #tpu.memory_space<vmem>>, %arg7: memref<1x1xf32, #tpu.memory_space<vmem>>, %arg8: memref<8x1xf32, #tpu.memory_space<vmem>>) attributes {dimension_semantics = [#tpu.dimension_semantics<parallel>], iteration_bounds = array<i64: 1>, scalar_prefetch = 0 : i64, scratch_operands = 0 : i64, tpu.core_type = #tpu.core_type<tc>, window_params = [{transform_indices = @transform_0, window_bounds = array<i64: 8, 32>}, {pipeline_mode = #tpu.pipeline_mode<synchronous>, transform_indices = @transform_1, window_bounds = array<i64: 32, 128>}, {pipeline_mode = #tpu.pipeline_mode<synchronous>, transform_indices = @transform_2, window_bounds = array<i64: 1, 128>}, {pipeline_mode = #tpu.pipeline_mode<synchronous>, transform_indices = @transform_3, window_bounds = array<i64: 128, 128>}, {pipeline_mode = #tpu.pipeline_mode<synchronous>, transform_indices = @transform_4, window_bounds = array<i64: 1, 128>}, {pipeline_mode = #tpu.pipeline_mode<synchronous>, transform_indices = @transform_5, window_bounds = array<i64: 1, 128>}, {pipeline_mode = #tpu.pipeline_mode<synchronous>, transform_indices = @transform_6, window_bounds = array<i64: 1, 1>}, {transform_indices = @transform_7, window_bounds = array<i64: 8, 1>}]} {
    %c0 = arith.constant 0 : index
    %c0_0 = arith.constant 0 : index
    %0 = vector.load %arg1[%c0, %c0_0] : memref<8x32xf32, #tpu.memory_space<vmem>>, vector<8x32xf32>
    %c0_1 = arith.constant 0 : index
    %c0_2 = arith.constant 0 : index
    %1 = vector.load %arg2[%c0_1, %c0_2] : memref<32x128xf32, #tpu.memory_space<vmem>>, vector<32x128xf32>
    %cst = arith.constant dense<0.000000e+00> : vector<8x128xf32>
    %2 = tpu.matmul %0, %1, %cst {dimension_numbers = #tpu.dot_dimension_numbers<[1], [0], [0], [1], [0, 0, 1, 1], [], []>} : vector<8x32xf32>, vector<32x128xf32>, vector<8x128xf32> -> vector<8x128xf32>
    %c0_3 = arith.constant 0 : index
    %c0_4 = arith.constant 0 : index
    %3 = vector.load %arg3[%c0_3, %c0_4] : memref<1x128xf32, #tpu.memory_space<vmem>>, vector<1x128xf32>
    %4 = vector.broadcast %3 : vector<1x128xf32> to vector<8x128xf32>
    %5 = arith.addf %2, %4 : vector<8x128xf32>
    %cst_5 = arith.constant 0.000000e+00 : f32
    %6 = vector.broadcast %cst_5 : f32 to vector<8x128xf32>
    %7 = arith.maximumf %5, %6 : vector<8x128xf32>
    %c0_6 = arith.constant 0 : index
    %c0_7 = arith.constant 0 : index
    %8 = vector.load %arg4[%c0_6, %c0_7] : memref<128x128xf32, #tpu.memory_space<vmem>>, vector<128x128xf32>
    %cst_8 = arith.constant dense<0.000000e+00> : vector<8x128xf32>
    %9 = tpu.matmul %7, %8, %cst_8 {dimension_numbers = #tpu.dot_dimension_numbers<[1], [0], [0], [1], [0, 0, 1, 1], [], []>} : vector<8x128xf32>, vector<128x128xf32>, vector<8x128xf32> -> vector<8x128xf32>
    %c0_9 = arith.constant 0 : index
    %c0_10 = arith.constant 0 : index
    %10 = vector.load %arg5[%c0_9, %c0_10] : memref<1x128xf32, #tpu.memory_space<vmem>>, vector<1x128xf32>
    %11 = vector.broadcast %10 : vector<1x128xf32> to vector<8x128xf32>
    %12 = arith.addf %9, %11 : vector<8x128xf32>
    %cst_11 = arith.constant 0.000000e+00 : f32
    %13 = vector.broadcast %cst_11 : f32 to vector<8x128xf32>
    %14 = arith.maximumf %12, %13 : vector<8x128xf32>
    %c0_12 = arith.constant 0 : index
    %c0_13 = arith.constant 0 : index
    %15 = vector.load %arg6[%c0_12, %c0_13] : memref<1x128xf32, #tpu.memory_space<vmem>>, vector<1x128xf32>
    %16 = vector.broadcast %15 : vector<1x128xf32> to vector<8x128xf32>
    %17 = arith.mulf %14, %16 : vector<8x128xf32>
    %cst_14 = arith.constant dense<0.000000e+00> : vector<8xf32>
    %18 = vector.multi_reduction <add>, %17, %cst_14 [1] : vector<8x128xf32> to vector<8xf32>
    %19 = vector.shape_cast %18 : vector<8xf32> to vector<8x1xf32>
    %c0_15 = arith.constant 0 : index
    %c0_16 = arith.constant 0 : index
    %20 = vector.load %arg7[%c0_15, %c0_16] : memref<1x1xf32, #tpu.memory_space<vmem>>, vector<1x1xf32>
    %21 = vector.broadcast %20 : vector<1x1xf32> to vector<8x1xf32>
    %22 = arith.addf %19, %21 : vector<8x1xf32>
    %c0_17 = arith.constant 0 : index
    %c0_18 = arith.constant 0 : index
    %23 = vector.load %arg8[%c0_17, %c0_18] : memref<8x1xf32, #tpu.memory_space<vmem>>, vector<8x1xf32>
    tpu.vector_store %arg8[%c0_17, %c0_18], %22 {strides = array<i32>} : memref<8x1xf32, #tpu.memory_space<vmem>>, vector<8x1xf32>,
    return
  }
  func.func @transform_0(%arg0: i32) -> (i32, i32) {
    %c0_i32 = arith.constant 0 : i32
    %c0_i32_0 = arith.constant 0 : i32
    return %arg0, %c0_i32 : i32, i32
  }
  func.func @transform_1(%arg0: i32) -> (i32, i32) {
    %c0_i32 = arith.constant 0 : i32
    %c0_i32_0 = arith.constant 0 : i32
    %c0_i32_1 = arith.constant 0 : i32
    return %c0_i32, %c0_i32_0 : i32, i32
  }
  func.func @transform_2(%arg0: i32) -> (i32, i32) {
    %c0_i32 = arith.constant 0 : i32
    %c0_i32_0 = arith.constant 0 : i32
    %c0_i32_1 = arith.constant 0 : i32
    return %c0_i32, %c0_i32_0 : i32, i32
  }
  func.func @transform_3(%arg0: i32) -> (i32, i32) {
    %c0_i32 = arith.constant 0 : i32
    %c0_i32_0 = arith.constant 0 : i32
    %c0_i32_1 = arith.constant 0 : i32
    return %c0_i32, %c0_i32_0 : i32, i32
  }
  func.func @transform_4(%arg0: i32) -> (i32, i32) {
    %c0_i32 = arith.constant 0 : i32
    %c0_i32_0 = arith.constant 0 : i32
    %c0_i32_1 = arith.constant 0 : i32
    return %c0_i32, %c0_i32_0 : i32, i32
  }
  func.func @transform_5(%arg0: i32) -> (i32, i32) {
    %c0_i32 = arith.constant 0 : i32
    %c0_i32_0 = arith.constant 0 : i32
    %c0_i32_1 = arith.constant 0 : i32
    return %c0_i32, %c0_i32_0 : i32, i32
  }
  func.func @transform_6(%arg0: i32) -> (i32, i32) {
    %c0_i32 = arith.constant 0 : i32
    %c0_i32_0 = arith.constant 0 : i32
    %c0_i32_1 = arith.constant 0 : i32
    return %c0_i32, %c0_i32_0 : i32, i32
  }
  func.func @transform_7(%arg0: i32) -> (i32, i32) {
    %c0_i32 = arith.constant 0 : i32
    %c0_i32_0 = arith.constant 0 : i32
    return %arg0, %c0_i32 : i32, i32
  }
}

</mosaic_0001>

<llo_original>
// kernel: discriminator_forward.1
$region0: #{discriminator_forward.1}
  #allocation0 [shape = 'u32[]', space=smem, size = 0x4, offset = 0x4, fixed_abs, tag = 'smem constant byte address 0x4 - core index']
  #allocation1 [shape = 'u32[144,128]{1,0:T(1,128)}', space=vmem, size = 0x12000, scoped, tag = 'internal scratch']
  #allocation2 [shape = 'f32[1,1]{1,0:T(1,128)S(1)}', space=vmem, size = 0x200, scoped, tag = 'scoped memory for discriminator_forward.1']
  %s0 = inlined_call_operand.hbm [shape: f32[8,32], index: 0, kind: input, shape index: {}]
  %s1 = inlined_call_operand.hbm [shape: f32[32,128], index: 1, kind: input, shape index: {}]
  %s2 = inlined_call_operand.vmem [shape: f32[1,128], index: 2, kind: input, shape index: {}]
  %s3 = inlined_call_operand.hbm [shape: f32[128,128], index: 3, kind: input, shape index: {}]
  %s4 = inlined_call_operand.vmem [shape: f32[1,128], index: 4, kind: input, shape index: {}]
  %s5 = inlined_call_operand.vmem [shape: f32[1,128], index: 5, kind: input, shape index: {}]
  %s6 = inlined_call_operand.<no memory space> [shape: f32[1,1], index: 6, kind: input, shape index: {}]
  %s7 = inlined_call_operand.vmem [shape: f32[8,1], index: 7, kind: output, shape index: {}]
  %s8 = sld [smem:[#allocation0]]
  $region50: #{discriminator_forward.1} parent=0
    _
  %s10 = ssub.s32 1, %s8
  %s11 = scalar_select 0, %s10, %s8
  %v12 = vstv %s6
  %13 = vst [vmem:[#allocation2] sm:$0x1] %v12
  $region1: #{discriminator_forward.1} parent=0
    #allocation3 [shape = 'u8[4096]{0}', space=vmem, size = 0x1000, scoped, tag = 'input window, operand 0, single buffered']
    #allocation4 [shape = 's32[1]{0}', space=sflag, size = 0x4, scoped, tag = 'scoped memory for discriminator_forward.1']
    #allocation5 [shape = 'u8[16384]{0}', space=vmem, size = 0x4000, scoped, tag = 'input window, operand 1, single buffered']
    #allocation6 [shape = 's32[1]{0}', space=sflag, size = 0x4, scoped, tag = 'scoped memory for discriminator_forward.1']
    #allocation7 [shape = 'u8[65536]{0}', space=vmem, size = 0x10000, scoped, tag = 'input window, operand 3, single buffered']
    %14 = vsyncpa [#allocation4], 0
    %15 = vsyncpa [#allocation6], 0
    // Predicated region
    $region2: #{discriminator_forward.1} parent=1 // pred_check
      _
    $region3: #{discriminator_forward.1} parent=1 // pred_check_branch
      %17 = sbr.rel (0) target = $region5
    $region4: #{discriminator_forward.1} parent=1 // pred_region
      %s19 = ssub.s32 128, 128
      %20 = vsyncadd [#allocation4], %s19
      %s22 = sshll.u32 [#allocation3], 4
      %s23 = int_to_ptr.vmem [resolvable:$true] %s22
      %25 = dma.hbm_to_vmem [thread:$0]  %s0, 128, %s23, [#allocation4]
    $region5: #{discriminator_forward.1} parent=1 // pred_fallthru
      _
    // Predicated region
    $region6: #{discriminator_forward.1} parent=1 // pred_check
      _
    $region7: #{discriminator_forward.1} parent=1 // pred_check_branch
      %27 = sbr.rel (0) target = $region9
    $region8: #{discriminator_forward.1} parent=1 // pred_region
      %s29 = ssub.s32 512, 512
      %30 = vsyncadd [#allocation6], %s29
      %s31 = sshll.u32 [#allocation5], 4
      %s32 = int_to_ptr.vmem [resolvable:$true] %s31
      %37 = dma.hbm_to_vmem [thread:$0]  %s1, 512, %s32, [#allocation6], 128, 128, 8
    $region9: #{discriminator_forward.1} parent=1 // pred_fallthru
      _
    // Predicated region
    $region10: #{discriminator_forward.1} parent=1 // pred_check
      _
    $region11: #{discriminator_forward.1} parent=1 // pred_check_branch
      %39 = sbr.rel (0) target = $region13
    $region12: #{discriminator_forward.1} parent=1 // pred_region
      _
    $region13: #{discriminator_forward.1} parent=1 // pred_fallthru
      _
    // Predicated region
    $region14: #{discriminator_forward.1} parent=1 // pred_check
      _
    $region15: #{discriminator_forward.1} parent=1 // pred_check_branch
      %41 = sbr.rel (0) target = $region17
    $region16: #{discriminator_forward.1} parent=1 // pred_region
      %s43 = ssub.s32 2048, 2048
      %44 = vsyncadd [#allocation6], %s43
      %s45 = sshll.u32 [#allocation7], 4
      %s46 = int_to_ptr.vmem [resolvable:$true] %s45
      %51 = dma.hbm_to_vmem [thread:$0]  %s3, 2048, %s46, [#allocation6], 128, 128, 8
    $region17: #{discriminator_forward.1} parent=1 // pred_fallthru
      _
    // Predicated region
    $region18: #{discriminator_forward.1} parent=1 // pred_check
      _
    $region19: #{discriminator_forward.1} parent=1 // pred_check_branch
      %53 = sbr.rel (0) target = $region21
    $region20: #{discriminator_forward.1} parent=1 // pred_region
      _
    $region21: #{discriminator_forward.1} parent=1 // pred_fallthru
      _
    // Predicated region
    $region22: #{discriminator_forward.1} parent=1 // pred_check
      _
    $region23: #{discriminator_forward.1} parent=1 // pred_check_branch
      %55 = sbr.rel (0) target = $region25
    $region24: #{discriminator_forward.1} parent=1 // pred_region
      _
    $region25: #{discriminator_forward.1} parent=1 // pred_fallthru
      _
    // Predicated region
    $region26: #{discriminator_forward.1} parent=1 // pred_check
      _
    $region27: #{discriminator_forward.1} parent=1 // pred_check_branch
      %57 = sbr.rel (0) target = $region29
    $region28: #{discriminator_forward.1} parent=1 // pred_region
      _
    $region29: #{discriminator_forward.1} parent=1 // pred_fallthru
      _
    // Predicated region
    $region30: #{discriminator_forward.1} parent=1 // pred_check
      _
    $region31: #{discriminator_forward.1} parent=1 // pred_check_branch
      %59 = sbr.rel (0) target = $region33
    $region32: #{discriminator_forward.1} parent=1 // pred_region
      %60 = dma.done [#allocation4], 128
    $region33: #{discriminator_forward.1} parent=1 // pred_fallthru
      _
    // Predicated region
    $region34: #{discriminator_forward.1} parent=1 // pred_check
      _
    $region35: #{discriminator_forward.1} parent=1 // pred_check_branch
      %62 = sbr.rel (0) target = $region37
    $region36: #{discriminator_forward.1} parent=1 // pred_region
      %63 = dma.done [#allocation6], 512
    $region37: #{discriminator_forward.1} parent=1 // pred_fallthru
      _
    // Predicated region
    $region38: #{discriminator_forward.1} parent=1 // pred_check
      _
    $region39: #{discriminator_forward.1} parent=1 // pred_check_branch
      %65 = sbr.rel (0) target = $region41
    $region40: #{discriminator_forward.1} parent=1 // pred_region
      %66 = dma.done [#allocation6], 2048
    $region41: #{discriminator_forward.1} parent=1 // pred_fallthru
      _
    %v67 = vld [vmem:[#allocation3] sm:$0xff]
    %v68 = vld [vmem:[#allocation5] sm:$0xff]
    %v69 = vld [vmem:[#allocation5 + $0x8] sm:$0xff]
    %v70 = vld [vmem:[#allocation5 + $0x10] sm:$0xff]
    %v71 = vld [vmem:[#allocation5 + $0x18] sm:$0xff]
    %v72 = vld [vmem:[%s2] sm:$0x1]
    %v74 = vlaneseq
    %v75 = vshrl.u32 %v74, 7
    %v76 = vsub.s32 0, %v75
    %v77 = vrot.slane %v72, %v76
    %vm79 = vcmask 261120
    %v81 = vsel %vm79, %v67, 0
    %83 = vmatprep.subr.mxu0 0.0
    %84 = vmatpush1.msra.mxu0 %v68
    %85 = vmatprep.subr.mxu0 0.0
    %86 = vmatpush1.msra.mxu0 %v69
    %87 = vmatprep.subr.mxu0 0.0
    %88 = vmatpush1.msra.mxu0 %v70
    %89 = vmatprep.subr.mxu0 0.0
    %90 = vmatpush1.msra.mxu0 %v71
    %91 = vmatprep.subr.mxu0 0.0
    %92 = vmatpush1.msra.mxu0 0.0
    %93 = vmatprep.subr.mxu0 0.0
    %94 = vmatpush1.msra.mxu0 0.0
    %95 = vmatprep.subr.mxu0 0.0
    %96 = vmatpush1.msra.mxu0 0.0
    %97 = vmatprep.subr.mxu0 0.0
    %98 = vmatpush1.msra.mxu0 0.0
    %99 = vmatprep.subr.mxu0 0.0
    %100 = vmatpush1.msra.mxu0 0.0
    %101 = vmatprep.subr.mxu0 0.0
    %102 = vmatpush1.msra.mxu0 0.0
    %103 = vmatprep.subr.mxu0 0.0
    %104 = vmatpush1.msra.mxu0 0.0
    %105 = vmatprep.subr.mxu0 0.0
    %106 = vmatpush1.msra.mxu0 0.0
    %107 = vmatprep.subr.mxu0 0.0
    %108 = vmatpush1.msra.mxu0 0.0
    %109 = vmatprep.subr.mxu0 0.0
    %110 = vmatpush1.msra.mxu0 0.0
    %111 = vmatprep.subr.mxu0 0.0
    %112 = vmatpush1.msra.mxu0 0.0
    %113 = vmatprep.subr.mxu0 0.0
    %114 = vmatpush1.msra.mxu0 0.0
    %115 = vmatprep.subr.mxu0 0.0
    %116 = vmatpush1.msra.mxu0 0.0
    %117 = vmatprep.subr.mxu0 0.0
    %118 = vmatpush1.msra.mxu0 0.0
    %119 = vmatprep.subr.mxu0 0.0
    %120 = vmatpush1.msra.mxu0 0.0
    %121 = vmatprep.subr.mxu0 0.0
    %122 = vmatpush1.msra.mxu0 0.0
    %123 = vmatprep.subr.mxu0 0.0
    %124 = vmatpush1.msra.mxu0 0.0
    %125 = vmatprep.subr.mxu0 0.0
    %126 = vmatpush1.msra.mxu0 0.0
    %127 = vmatprep.subr.mxu0 0.0
    %128 = vmatpush1.msra.mxu0 0.0
    %129 = vmatprep.subr.mxu0 0.0
    %130 = vmatpush1.msra.mxu0 0.0
    %131 = vmatprep.subr.mxu0 0.0
    %132 = vmatpush1.msra.mxu0 0.0
    %133 = vmatprep.subr.mxu0 0.0
    %134 = vmatpush1.msra.mxu0 0.0
    %135 = vmatprep.subr.mxu0 0.0
    %136 = vmatpush1.msra.mxu0 0.0
    %137 = vmatprep.subr.mxu0 0.0
    %138 = vmatpush1.msra.mxu0 0.0
    %139 = vmatprep.subr.mxu0 0.0
    %140 = vmatpush1.msra.mxu0 0.0
    %141 = vmatprep.subr.mxu0 0.0
    %142 = vmatpush1.msra.mxu0 0.0
    %143 = vmatprep.subr.mxu0 0.0
    %144 = vmatpush1.msra.mxu0 0.0
    %145 = vmatprep.subr.mxu0 0.0
    %146 = vmatpush1.msra.mxu0 0.0
    %147 = vmatprep.mubr.f32.mxu0 0.0
    %148 = vmatmul.mubr.f32.gmra.mrb[0].mxu0 %v81
    %v149 = vpop.f32.mrb[0].mxu0
    %v150 = vadd.f32 %v77, %v149
    %v151 = vpop.f32.mrb[0].mxu0
    %152 = vdwg.mxu0
    %v153 = vmax.f32 %v150, 0.0
    %v154 = vld [vmem:[#allocation7] sm:$0xff]
    %v155 = vld [vmem:[#allocation7 + $0x8] sm:$0xff]
    %v156 = vld [vmem:[#allocation7 + $0x10] sm:$0xff]
    %v157 = vld [vmem:[#allocation7 + $0x18] sm:$0xff]
    %v158 = vld [vmem:[#allocation7 + $0x20] sm:$0xff]
    %v159 = vld [vmem:[#allocation7 + $0x28] sm:$0xff]
    %v160 = vld [vmem:[#allocation7 + $0x30] sm:$0xff]
    %v161 = vld [vmem:[#allocation7 + $0x38] sm:$0xff]
    %v162 = vld [vmem:[#allocation7 + $0x40] sm:$0xff]
    %v163 = vld [vmem:[#allocation7 + $0x48] sm:$0xff]
    %v164 = vld [vmem:[#allocation7 + $0x50] sm:$0xff]
    %v165 = vld [vmem:[#allocation7 + $0x58] sm:$0xff]
    %v166 = vld [vmem:[#allocation7 + $0x60] sm:$0xff]
    %v167 = vld [vmem:[#allocation7 + $0x68] sm:$0xff]
    %v168 = vld [vmem:[#allocation7 + $0x70] sm:$0xff]
    %v169 = vld [vmem:[#allocation7 + $0x78] sm:$0xff]
    %v170 = vld [vmem:[%s4] sm:$0x1]
    %v172 = vlaneseq
    %v173 = vshrl.u32 %v172, 7
    %v174 = vsub.s32 0, %v173
    %v175 = vrot.slane %v170, %v174
    %177 = vmatprep.subr.mxu0 0.0
    %178 = vmatpush1.msra.mxu0 %v154
    %179 = vmatprep.subr.mxu0 0.0
    %180 = vmatpush1.msra.mxu0 %v155
    %181 = vmatprep.subr.mxu0 0.0
    %182 = vmatpush1.msra.mxu0 %v156
    %183 = vmatprep.subr.mxu0 0.0
    %184 = vmatpush1.msra.mxu0 %v157
    %185 = vmatprep.subr.mxu0 0.0
    %186 = vmatpush1.msra.mxu0 %v158
    %187 = vmatprep.subr.mxu0 0.0
    %188 = vmatpush1.msra.mxu0 %v159
    %189 = vmatprep.subr.mxu0 0.0
    %190 = vmatpush1.msra.mxu0 %v160
    %191 = vmatprep.subr.mxu0 0.0
    %192 = vmatpush1.msra.mxu0 %v161
    %193 = vmatprep.subr.mxu0 0.0
    %194 = vmatpush1.msra.mxu0 %v162
    %195 = vmatprep.subr.mxu0 0.0
    %196 = vmatpush1.msra.mxu0 %v163
    %197 = vmatprep.subr.mxu0 0.0
    %198 = vmatpush1.msra.mxu0 %v164
    %199 = vmatprep.subr.mxu0 0.0
    %200 = vmatpush1.msra.mxu0 %v165
    %201 = vmatprep.subr.mxu0 0.0
    %202 = vmatpush1.msra.mxu0 %v166
    %203 = vmatprep.subr.mxu0 0.0
    %204 = vmatpush1.msra.mxu0 %v167
    %205 = vmatprep.subr.mxu0 0.0
    %206 = vmatpush1.msra.mxu0 %v168
    %207 = vmatprep.subr.mxu0 0.0
    %208 = vmatpush1.msra.mxu0 %v169
    %209 = vmatprep.subr.mxu0 0.0
    %210 = vmatpush1.msra.mxu0 0.0
    %211 = vmatprep.subr.mxu0 0.0
    %212 = vmatpush1.msra.mxu0 0.0
    %213 = vmatprep.subr.mxu0 0.0
    %214 = vmatpush1.msra.mxu0 0.0
    %215 = vmatprep.subr.mxu0 0.0
    %216 = vmatpush1.msra.mxu0 0.0
    %217 = vmatprep.subr.mxu0 0.0
    %218 = vmatpush1.msra.mxu0 0.0
    %219 = vmatprep.subr.mxu0 0.0
    %220 = vmatpush1.msra.mxu0 0.0
    %221 = vmatprep.subr.mxu0 0.0
    %222 = vmatpush1.msra.mxu0 0.0
    %223 = vmatprep.subr.mxu0 0.0
    %224 = vmatpush1.msra.mxu0 0.0
    %225 = vmatprep.subr.mxu0 0.0
    %226 = vmatpush1.msra.mxu0 0.0
    %227 = vmatprep.subr.mxu0 0.0
    %228 = vmatpush1.msra.mxu0 0.0
    %229 = vmatprep.subr.mxu0 0.0
    %230 = vmatpush1.msra.mxu0 0.0
    %231 = vmatprep.subr.mxu0 0.0
    %232 = vmatpush1.msra.mxu0 0.0
    %233 = vmatprep.subr.mxu0 0.0
    %234 = vmatpush1.msra.mxu0 0.0
    %235 = vmatprep.subr.mxu0 0.0
    %236 = vmatpush1.msra.mxu0 0.0
    %237 = vmatprep.subr.mxu0 0.0
    %238 = vmatpush1.msra.mxu0 0.0
    %239 = vmatprep.subr.mxu0 0.0
    %240 = vmatpush1.msra.mxu0 0.0
    %241 = vmatprep.mubr.f32.mxu0 0.0
    %242 = vmatmul.mubr.f32.gmra.mrb[0].mxu0 %v153
    %v243 = vpop.f32.mrb[0].mxu0
    %v244 = vadd.f32 %v175, %v243
    %v245 = vpop.f32.mrb[0].mxu0
    %246 = vdwg.mxu0
    %v247 = vmax.f32 %v244, 0.0
    %v248 = vld [vmem:[%s5] sm:$0x1]
    %v250 = vlaneseq
    %v251 = vshrl.u32 %v250, 7
    %v252 = vsub.s32 0, %v251
    %v253 = vrot.slane %v248, %v252
    %v255 = vmul.f32 %v247, %v253
    %256 = vadd.xlane.f32.xlu0 %v255
    %v257 = vpop.xlane.xlu0 %256
    %v258 = vld [vmem:[#allocation2] sm:$0x1]
    %v260 = vlaneseq
    %v261 = vshrl.u32 %v260, 7
    %v262 = vsub.s32 0, %v261
    %v263 = vrot.slane %v258, %v262
    %v265 = vadd.f32 %v257, %v263
    %vm266 = vcmask 7168
    %267 = vst.msk [vmem:[%s7] sm:$0xff] %vm266, %v265
    // Predicated region
    $region42: #{discriminator_forward.1} parent=1 // pred_check
      _
    $region43: #{discriminator_forward.1} parent=1 // pred_check_branch
      %269 = sbr.rel (0) target = $region45
    $region44: #{discriminator_forward.1} parent=1 // pred_region
      _
    $region45: #{discriminator_forward.1} parent=1 // pred_fallthru
      _
    // Predicated region
    $region46: #{discriminator_forward.1} parent=1 // pred_check
      _
    $region47: #{discriminator_forward.1} parent=1 // pred_check_branch
      %271 = sbr.rel (0) target = $region49
    $region48: #{discriminator_forward.1} parent=1 // pred_region
      _
    $region49: #{discriminator_forward.1} parent=1 // pred_fallthru
      _
    %272 = vsyncpa [#allocation4], 1
    %273 = vsyncpa [#allocation6], 1

</llo_original>
